<compile_context>
chip_gen: v5e
topology: v5e:2x2
jax: 0.10.0
libtpu: 0.0.40
codegen_flags: <defaults>
</compile_context>

<pallas_src>
import functools

import jax
import jax.numpy as jnp
from jax.experimental import pallas as pl
from jax.experimental.pallas import tpu as pltpu

POOL_K = 2  # pooling window size == stride


def _dt_pool_kernel(x_ref, a_ref, b_ref, sel_ref, o_ref, *, k, d2):
    # x_ref:   (T, ho*k, wo*k)  raw activation block (lane-dense width last)
    # a_ref:   (T, 1, 1)        per-row alpha (height penalty coefficient)
    # b_ref:   (T, 1, 1)        per-row beta  (width  penalty coefficient)
    # sel_ref: (wo*k, wo)       one-hot lane-compaction matrix, sel[k*j, j] = 1
    # o_ref:   (T, ho, wo)      pooled output block
    T, hblk, wt = x_ref.shape
    ho = hblk // k
    wo = o_ref.shape[2]

    alpha = a_ref[...].astype(jnp.float32)   # (T, 1, 1)
    beta = b_ref[...].astype(jnp.float32)    # (T, 1, 1)

    # Height (p) offsets: sublane stride-k slices of the dense block, f32 math.
    yp = x_ref[:, pl.ds(0, ho, stride=k), :].astype(jnp.float32) - alpha * d2[0]
    for p in range(1, k):
        cand = x_ref[:, pl.ds(p, ho, stride=k), :].astype(jnp.float32) - alpha * d2[p]
        yp = jnp.maximum(yp, cand)

    # Width (q) offsets in the interleaved lane domain: XLU rolls are a free
    # slot in this HBM-bound kernel.  Valid results land on lanes that are
    # multiples of k; other lanes are discarded by the compaction below.
    qm = yp - beta * d2[0]
    for q in range(1, k):
        shifted = pltpu.roll(yp, shift=wt - q, axis=2)   # lane l <- lane l + q
        qm = jnp.maximum(qm, shifted - beta * d2[q])

    # Compact every k-th lane with a one-hot selection matmul (MXU is idle,
    # and 0/1 weights keep the result exact).
    out = jnp.dot(qm.reshape(T * ho, wt), sel_ref[...],
                  preferred_element_type=jnp.float32)
    o_ref[...] = out.reshape(T, ho, wo).astype(o_ref.dtype)


def _pick_tiles(R, Ho, Wo, k, in_itemsize, out_itemsize,
                budget_bytes=24 * 1024 * 1024):
    """Choose (row_tile, ho_tile, wo_tile) with legal (8,128) layouts.

    Keeps double-buffered blocks + f32 intermediates under ~budget_bytes so a
    single config compiles on v7x (64 MiB physical VMEM) as well as v5e/v6e.
    """
    # Lane (output-width) tile: full extent when modest, else a 128-mult divisor.
    if Wo <= 2048:
        wo_tile = Wo
    else:
        wo_tile = next((c for c in (2048, 1024, 512, 256, 128) if Wo % c == 0), Wo)
        # TODO(synk): pad W to a 128*k multiple for awkward widths instead of
        # falling back to the full extent.

    # Sublane (output-height) tile: keep it a multiple of 8 (or full extent with
    # row_tile == 1) so the in-kernel (T, ho, wt) <-> (T*ho, wt) reshapes are
    # relayout-free.
    if Ho % 8 != 0:
        ho_tile, force_single_row = Ho, True
    elif Ho <= 64:
        ho_tile, force_single_row = Ho, False
    else:
        ho_tile = max(d for d in range(8, 65, 8) if Ho % d == 0)
        force_single_row = False

    wt = wo_tile * k
    hblk = ho_tile * k
    per_row = (2 * hblk * wt * in_itemsize            # x block, double-buffered
               + 2 * ho_tile * wo_tile * out_itemsize  # out block, double-buffered
               + 2 * ho_tile * wt * 4)                 # f32 intermediates (yp, qm)
    sel_bytes = 2 * wt * wo_tile * 4

    if force_single_row:
        row_tile = 1
    else:
        cap = max(1, (budget_bytes - sel_bytes) // max(1, per_row))
        row_tile = max((d for d in range(1, R + 1) if R % d == 0 and d <= cap),
                       default=1)
        # Guarantee >= 2 grid blocks somewhere so v7x's two TensorCores both
        # get work even when the spatial axes collapse to a single block.
        other_blocks = (Ho // ho_tile) * (Wo // wo_tile)
        if other_blocks == 1 and row_tile == R and R > 1:
            row_tile = max(d for d in range(1, R) if R % d == 0)

    return row_tile, ho_tile, wo_tile


def distance_transform_pool(x, alpha, beta, k=POOL_K):
    N, C, H, W = x.shape
    assert H % k == 0 and W % k == 0, "spatial dims must be divisible by k"
    Ho, Wo = H // k, W // k
    R = N * C

    # Free reshape (contiguous reinterpretation) — no extra HBM round trip.
    x3 = x.reshape(R, H, W)

    # Per-row separable penalty coefficients (tiny, f32).
    ctr = (k - 1) / 2.0
    d2 = tuple(float((p - ctr) ** 2) for p in range(k))
    alpha_rows = jnp.tile(alpha.astype(jnp.float32), N).reshape(R, 1, 1)
    beta_rows = jnp.tile(beta.astype(jnp.float32), N).reshape(R, 1, 1)

    row_tile, ho_tile, wo_tile = _pick_tiles(
        R, Ho, Wo, k, x.dtype.itemsize, x.dtype.itemsize)
    wt = wo_tile * k
    hblk = ho_tile * k
    grid = (R // row_tile, Ho // ho_tile, Wo // wo_tile)

    # One-hot lane-compaction matrix for this tile size: sel[k*j, j] = 1.
    sel = (jnp.arange(wt)[:, None] == k * jnp.arange(wo_tile)[None, :]
           ).astype(jnp.float32)

    kernel = functools.partial(_dt_pool_kernel, k=k, d2=d2)

    out = pl.pallas_call(
        kernel,
        out_shape=jax.ShapeDtypeStruct((R, Ho, Wo), x.dtype),
        grid_spec=pl.GridSpec(
            grid=grid,
            in_specs=[
                # raw activations, lane-dense width axis last
                pl.BlockSpec((row_tile, hblk, wt), lambda r, i, j: (r, i, j)),
                # per-row penalty coefficients
                pl.BlockSpec((row_tile, 1, 1), lambda r, i, j: (r, 0, 0)),
                pl.BlockSpec((row_tile, 1, 1), lambda r, i, j: (r, 0, 0)),
                # lane-compaction matrix (constant block index -> stays resident)
                pl.BlockSpec((wt, wo_tile), lambda r, i, j: (0, 0)),
            ],
            out_specs=pl.BlockSpec((row_tile, ho_tile, wo_tile),
                                   lambda r, i, j: (r, i, j)),
        ),
        compiler_params=pltpu.CompilerParams(
            dimension_semantics=("parallel", "parallel", "parallel"),
            vmem_limit_bytes=48 * 1024 * 1024,
        ),
    )(x3, alpha_rows, beta_rows, sel)
    return out.reshape(N, C, Ho, Wo)


class DistanceTransformPooling:
    """Pallas port of models/layer.DistanceTransformPooling (arXiv:1409.5403)."""

    # TODO(synk): the reference forward() is an empty stub (`pass`); this
    # implements the cited paper's distance-transform max-pooling as the
    # intended op, with synthetic deterministic per-channel alpha/beta.
    def __init__(self, n_channels, k=POOL_K):
        self.k = k
        self.alpha = 0.10 + 0.05 * jnp.arange(n_channels, dtype=jnp.float32)
        self.beta = 0.20 + 0.05 * jnp.arange(n_channels, dtype=jnp.float32)

    def __call__(self, x):
        return distance_transform_pool(x, self.alpha, self.beta, self.k)


def _reference(x, alpha, beta, k):
    # pure-JAX reference of the same semantics (f32 accumulation)
    N, C, H, W = x.shape
    Ho, Wo = H // k, W // k
    xw = x.reshape(N, C, Ho, k, Wo, k).transpose(0, 1, 3, 5, 2, 4)  # (N,C,k,k,Ho,Wo)
    ctr = (k - 1) / 2.0
    d2 = (jnp.arange(k, dtype=jnp.float32) - ctr) ** 2
    pen = (alpha[:, None, None] * d2[None, :, None]
           + beta[:, None, None] * d2[None, None, :])               # (C,k,k)
    y = xw.astype(jnp.float32) - pen[None, :, :, :, None, None]
    return jnp.max(y, axis=(2, 3)).astype(x.dtype)


if __name__ == "__main__":
    key = jax.random.PRNGKey(0)
    N, C, H, W = 2, 4, 16, 16
    x = jax.random.normal(key, (N, C, H, W), dtype=jnp.float32)

    module = DistanceTransformPooling(n_channels=C)
    out = module(x)
    out = jax.block_until_ready(out)

    ref = _reference(x, module.alpha, module.beta, module.k)
    assert out.shape == (N, C, H // POOL_K, W // POOL_K)
    assert jnp.allclose(out, ref, atol=1e-5, rtol=1e-5)

    print("KERNEL_OK")
</pallas_src>

<mosaic_0001>
module attributes {stable_mosaic.version = 11 : i64} {
  func.func @_dt_pool_kernel(%arg0: i32, %arg1: i32, %arg2: i32, %arg3: memref<4x16x16xf32, #tpu.memory_space<vmem>>, %arg4: memref<4x1x1xf32, #tpu.memory_space<vmem>>, %arg5: memref<4x1x1xf32, #tpu.memory_space<vmem>>, %arg6: memref<16x8xf32, #tpu.memory_space<vmem>>, %arg7: memref<4x8x8xf32, #tpu.memory_space<vmem>>) attributes {dimension_semantics = [#tpu.dimension_semantics<parallel>, #tpu.dimension_semantics<parallel>, #tpu.dimension_semantics<parallel>], iteration_bounds = array<i64: 2, 1, 1>, scalar_prefetch = 0 : i64, scratch_operands = 0 : i64, tpu.core_type = #tpu.core_type<tc>, window_params = [{transform_indices = @transform_0, window_bounds = array<i64: 4, 16, 16>}, {transform_indices = @transform_1, window_bounds = array<i64: 4, 1, 1>}, {transform_indices = @transform_2, window_bounds = array<i64: 4, 1, 1>}, {pipeline_mode = #tpu.pipeline_mode<synchronous>, transform_indices = @transform_3, window_bounds = array<i64: 16, 8>}, {transform_indices = @transform_4, window_bounds = array<i64: 4, 8, 8>}]} {
    %c0 = arith.constant 0 : index
    %c0_0 = arith.constant 0 : index
    %c0_1 = arith.constant 0 : index
    %0 = vector.load %arg4[%c0, %c0_0, %c0_1] : memref<4x1x1xf32, #tpu.memory_space<vmem>>, vector<4x1x1xf32>
    %c0_2 = arith.constant 0 : index
    %c0_3 = arith.constant 0 : index
    %c0_4 = arith.constant 0 : index
    %1 = vector.load %arg5[%c0_2, %c0_3, %c0_4] : memref<4x1x1xf32, #tpu.memory_space<vmem>>, vector<4x1x1xf32>
    %c0_5 = arith.constant 0 : index
    %c0_6 = arith.constant 0 : index
    %c0_7 = arith.constant 0 : index
    %2 = tpu.strided_load %arg3[%c0_5, %c0_6, %c0_7] {strides = array<i32: 1, 2, 1>} : memref<4x16x16xf32, #tpu.memory_space<vmem>>, vector<4x8x16xf32>
    %cst = arith.constant 2.500000e-01 : f32
    %3 = vector.broadcast %cst : f32 to vector<4x1x1xf32>
    %4 = arith.mulf %0, %3 : vector<4x1x1xf32>
    %5 = vector.broadcast %4 : vector<4x1x1xf32> to vector<4x8x16xf32>
    %6 = arith.subf %2, %5 : vector<4x8x16xf32>
    %c0_8 = arith.constant 0 : index
    %c1 = arith.constant 1 : index
    %c0_9 = arith.constant 0 : index
    %7 = tpu.strided_load %arg3[%c0_8, %c1, %c0_9] {strides = array<i32: 1, 2, 1>} : memref<4x16x16xf32, #tpu.memory_space<vmem>>, vector<4x8x16xf32>
    %cst_10 = arith.constant 2.500000e-01 : f32
    %8 = vector.broadcast %cst_10 : f32 to vector<4x1x1xf32>
    %9 = arith.mulf %0, %8 : vector<4x1x1xf32>
    %10 = vector.broadcast %9 : vector<4x1x1xf32> to vector<4x8x16xf32>
    %11 = arith.subf %7, %10 : vector<4x8x16xf32>
    %12 = arith.maximumf %6, %11 : vector<4x8x16xf32>
    %cst_11 = arith.constant 2.500000e-01 : f32
    %13 = vector.broadcast %cst_11 : f32 to vector<4x1x1xf32>
    %14 = arith.mulf %1, %13 : vector<4x1x1xf32>
    %15 = vector.broadcast %14 : vector<4x1x1xf32> to vector<4x8x16xf32>
    %16 = arith.subf %12, %15 : vector<4x8x16xf32>
    %c15_i32 = arith.constant 15 : i32
    %17 = tpu.dynamic_rotate %12 by %c15_i32 dim 2 : vector<4x8x16xf32>, i32 -> vector<4x8x16xf32>
    %cst_12 = arith.constant 2.500000e-01 : f32
    %18 = vector.broadcast %cst_12 : f32 to vector<4x1x1xf32>
    %19 = arith.mulf %1, %18 : vector<4x1x1xf32>
    %20 = vector.broadcast %19 : vector<4x1x1xf32> to vector<4x8x16xf32>
    %21 = arith.subf %17, %20 : vector<4x8x16xf32>
    %22 = arith.maximumf %16, %21 : vector<4x8x16xf32>
    %23 = vector.shape_cast %22 : vector<4x8x16xf32> to vector<32x16xf32>
    %c0_13 = arith.constant 0 : index
    %c0_14 = arith.constant 0 : index
    %24 = vector.load %arg6[%c0_13, %c0_14] : memref<16x8xf32, #tpu.memory_space<vmem>>, vector<16x8xf32>
    %cst_15 = arith.constant dense<0.000000e+00> : vector<32x8xf32>
    %25 = tpu.matmul %23, %24, %cst_15 {dimension_numbers = #tpu.dot_dimension_numbers<[1], [0], [0], [1], [0, 0, 1, 1], [], []>} : vector<32x16xf32>, vector<16x8xf32>, vector<32x8xf32> -> vector<32x8xf32>
    %26 = vector.shape_cast %25 : vector<32x8xf32> to vector<4x8x8xf32>
    %c0_16 = arith.constant 0 : index
    %c0_17 = arith.constant 0 : index
    %c0_18 = arith.constant 0 : index
    %27 = vector.load %arg7[%c0_16, %c0_17, %c0_18] : memref<4x8x8xf32, #tpu.memory_space<vmem>>, vector<4x8x8xf32>
    tpu.vector_store %arg7[%c0_16, %c0_17, %c0_18], %26 {strides = array<i32>} : memref<4x8x8xf32, #tpu.memory_space<vmem>>, vector<4x8x8xf32>,
    return
  }
  func.func @transform_0(%arg0: i32, %arg1: i32, %arg2: i32) -> (i32, i32, i32) {
    %c0_i32 = arith.constant 0 : i32
    return %arg0, %arg1, %arg2 : i32, i32, i32
  }
  func.func @transform_1(%arg0: i32, %arg1: i32, %arg2: i32) -> (i32, i32, i32) {
    %c0_i32 = arith.constant 0 : i32
    %c0_i32_0 = arith.constant 0 : i32
    %c0_i32_1 = arith.constant 0 : i32
    return %arg0, %c0_i32, %c0_i32_0 : i32, i32, i32
  }
  func.func @transform_2(%arg0: i32, %arg1: i32, %arg2: i32) -> (i32, i32, i32) {
    %c0_i32 = arith.constant 0 : i32
    %c0_i32_0 = arith.constant 0 : i32
    %c0_i32_1 = arith.constant 0 : i32
    return %arg0, %c0_i32, %c0_i32_0 : i32, i32, i32
  }
  func.func @transform_3(%arg0: i32, %arg1: i32, %arg2: i32) -> (i32, i32) {
    %c0_i32 = arith.constant 0 : i32
    %c0_i32_0 = arith.constant 0 : i32
    %c0_i32_1 = arith.constant 0 : i32
    return %c0_i32, %c0_i32_0 : i32, i32
  }
  func.func @transform_4(%arg0: i32, %arg1: i32, %arg2: i32) -> (i32, i32, i32) {
    %c0_i32 = arith.constant 0 : i32
    return %arg0, %arg1, %arg2 : i32, i32, i32
  }
}

</mosaic_0001>

<llo_original>
// kernel: tpu_custom_call.1
$region0: #{tpu_custom_call.1}
  #allocation0 [shape = 'u32[]', space=smem, size = 0x4, offset = 0x4, fixed_abs, tag = 'smem constant byte address 0x4 - core index']
  #allocation1 [shape = 'u32[72,128]{1,0:T(1,128)}', space=vmem, size = 0x9000, scoped, tag = 'internal scratch']
  %s0 = inlined_call_operand.hbm [shape: f32[8,16,16], index: 0, kind: input, shape index: {}]
  %s1 = inlined_call_operand.vmem [shape: f32[8,1,1], index: 1, kind: input, shape index: {}]
  %s2 = inlined_call_operand.vmem [shape: f32[8,1,1], index: 2, kind: input, shape index: {}]
  %s3 = inlined_call_operand.vmem [shape: f32[16,8], index: 3, kind: input, shape index: {}]
  %s4 = inlined_call_operand.hbm [shape: f32[8,8,8], index: 4, kind: output, shape index: {}]
  %s5 = sld [smem:[#allocation0]]
  $region53: #{tpu_custom_call.1} parent=0
    _
  %s7 = ssub.s32 1, %s5
  %s8 = scalar_select 0, %s7, %s5
  $region1: #{tpu_custom_call.1} parent=0
    #allocation2 [shape = 'u8[65536]{0}', space=vmem, size = 0x10000, scoped, tag = 'input window, operand 0']
    #allocation3 [shape = 's32[2]{0}', space=sflag, size = 0x8, scoped, tag = 'scoped memory for tpu_custom_call.1']
    #allocation4 [shape = 's32[2]{0}', space=sflag, size = 0x8, scoped, tag = 'scoped memory for tpu_custom_call.1']
    #allocation5 [shape = 'u8[32768]{0}', space=vmem, size = 0x8000, scoped, tag = 'output window, operand 0']
    %9 = vsyncpa [#allocation3], 0
    %s10 = scalar_lea.sflag [#allocation3], 1
    %11 = vsyncpa %s10, 0
    %12 = vsyncpa [#allocation4], 0
    %s13 = scalar_lea.sflag [#allocation4], 1
    %14 = vsyncpa %s13, 0
    loop: start=0, step=1, limit=4
    $region2: #{tpu_custom_call.1} parent=1 // loop_pre_header
      _
    $region3: #{tpu_custom_call.1} parent=1 // loop_header
      %s16 = sphi 0, %s20
      %p17 = scmp.ge.s32.totalorder %s16, 4
      %s23 = sphi 0, %s42
      %s24 = sphi 0, %s38
      %s25 = sphi 0, %s34
      %s26 = sphi 0, %s23
      %s27 = sphi 0, %s24
      %s28 = sphi 0, %s25
      %s29 = sphi 0, %s26
      %s30 = sphi 0, %s27
      %s31 = sphi 0, %s28
      %s49 = sphi 0, %s51
      %s52 = sphi 0, %s49
      %s53 = sphi 0, %s52
      %s69 = sphi 0, %s53
      %s75 = sphi 0, %s77
      %s78 = sphi 0, %s75
      %s79 = sphi 0, %s78
      %s95 = sphi 0, %s79
      %s101 = sphi 0, %s103
      %s104 = sphi 0, %s101
      %s105 = sphi 0, %s104
      %s121 = sphi 0, %s105
      %s125 = sphi 0, %s125
      %s127 = sphi 0, %s125
      %s128 = sphi 0, %s127
      %s142 = sphi 0, %s128
      %s152 = sphi 0, %s154
      %s155 = sphi 0, %s152
      %s156 = sphi 0, %s155
      %s172 = sphi 0, %s156
    $region4: #{tpu_custom_call.1} parent=1 // loop_header_branch
      %19 = sbr.rel (%p17) target = $region8
    $region5: #{tpu_custom_call.1} parent=1 // loop_body
      %s21 = ssub.s32 %s16, 1
      %s22 = ssub.s32 %s16, 2
      %s32 = sadd.s32 1, %s25
      %p33 = scmp.ge.s32.totalorder %s32, 1
      %s34 = scalar_select %p33, 0, %s32
      %s35 = sadd.s32 1, %s24
      %s36 = scalar_select %p33, %s35, %s24
      %p37 = scmp.ge.s32.totalorder %s36, 1
      %s38 = scalar_select %p37, 0, %s36
      %s39 = sadd.s32 1, %s23
      %s40 = scalar_select %p37, %s39, %s23
      %p41 = scmp.ge.s32.totalorder %s40, 2
      %s42 = scalar_select %p41, 0, %s40
      %s43 = ssub.s32 %s23, %s42
      %s44 = ssub.s32 %s24, %s38
      %s45 = sor.u32 %s43, %s44
      %s46 = ssub.s32 %s25, %s34
      %s47 = sor.u32 %s45, %s46
      %p48 = scmp.eq.s32.totalorder %s47, 0
      %s50 = sadd.s32 %s49, 1
      %s51 = scalar_select %p48, %s49, %s50
      %p54 = pneg %p48
      %p55 = scmp.eq.s32.totalorder %s16, 1
      %p56 = por %p54, %p55
      %p57 = scmp.ne.s32.totalorder %s49, %s52
      %p58 = scmp.eq.s32.totalorder %s16, 0
      %p59 = por %p57, %p58
      %p60 = scmp.ne.s32.totalorder %s49, %s52
      %p61 = scmp.eq.s32.totalorder %s21, 1
      %p62 = por %p60, %p61
      %p63 = scmp.ne.s32.totalorder %s52, %s53
      %p64 = scmp.eq.s32.totalorder %s21, 0
      %p65 = por %p63, %p64
      %p66 = scmp.ne.s32.totalorder %s52, %s53
      %p67 = scmp.eq.s32.totalorder %s22, 1
      %p68 = por %p66, %p67
      %p70 = scmp.ne.s32.totalorder %s53, %s69
      %p71 = scmp.eq.s32.totalorder %s22, 0
      %p72 = por %p70, %p71
      %s73 = ssub.s32 %s23, %s42
      %p74 = scmp.eq.s32.totalorder %s73, 0
      %s76 = sadd.s32 %s75, 1
      %s77 = scalar_select %p74, %s75, %s76
      %p80 = pneg %p74
      %p81 = scmp.eq.s32.totalorder %s16, 1
      %p82 = por %p80, %p81
      %p83 = scmp.ne.s32.totalorder %s75, %s78
      %p84 = scmp.eq.s32.totalorder %s16, 0
      %p85 = por %p83, %p84
      %p86 = scmp.ne.s32.totalorder %s75, %s78
      %p87 = scmp.eq.s32.totalorder %s21, 1
      %p88 = por %p86, %p87
      %p89 = scmp.ne.s32.totalorder %s78, %s79
      %p90 = scmp.eq.s32.totalorder %s21, 0
      %p91 = por %p89, %p90
      %p92 = scmp.ne.s32.totalorder %s78, %s79
      %p93 = scmp.eq.s32.totalorder %s22, 1
      %p94 = por %p92, %p93
      %p96 = scmp.ne.s32.totalorder %s79, %s95
      %p97 = scmp.eq.s32.totalorder %s22, 0
      %p98 = por %p96, %p97
      %s99 = ssub.s32 %s23, %s42
      %p100 = scmp.eq.s32.totalorder %s99, 0
      %s102 = sadd.s32 %s101, 1
      %s103 = scalar_select %p100, %s101, %s102
      %p106 = pneg %p100
      %p107 = scmp.eq.s32.totalorder %s16, 1
      %p108 = por %p106, %p107
      %p109 = scmp.ne.s32.totalorder %s101, %s104
      %p110 = scmp.eq.s32.totalorder %s16, 0
      %p111 = por %p109, %p110
      %p112 = scmp.ne.s32.totalorder %s101, %s104
      %p113 = scmp.eq.s32.totalorder %s21, 1
      %p114 = por %p112, %p113
      %p115 = scmp.ne.s32.totalorder %s104, %s105
      %p116 = scmp.eq.s32.totalorder %s21, 0
      %p117 = por %p115, %p116
      %p118 = scmp.ne.s32.totalorder %s104, %s105
      %p119 = scmp.eq.s32.totalorder %s22, 1
      %p120 = por %p118, %p119
      %p122 = scmp.ne.s32.totalorder %s105, %s121
      %p123 = scmp.eq.s32.totalorder %s22, 0
      %p124 = por %p122, %p123
      %s126 = sadd.s32 %s125, 1
      %p129 = scmp.eq.s32.totalorder %s16, 1
      %p130 = scmp.ne.s32.totalorder %s125, %s127
      %p131 = scmp.eq.s32.totalorder %s16, 0
      %p132 = por %p130, %p131
      %p133 = scmp.ne.s32.totalorder %s125, %s127
      %p134 = scmp.eq.s32.totalorder %s21, 1
      %p135 = por %p133, %p134
      %p136 = scmp.ne.s32.totalorder %s127, %s128
      %p137 = scmp.eq.s32.totalorder %s21, 0
      %p138 = por %p136, %p137
      %p139 = scmp.ne.s32.totalorder %s127, %s128
      %p140 = scmp.eq.s32.totalorder %s22, 1
      %p141 = por %p139, %p140
      %p143 = scmp.ne.s32.totalorder %s128, %s142
      %p144 = scmp.eq.s32.totalorder %s22, 0
      %p145 = por %p143, %p144
      %s146 = ssub.s32 %s23, %s42
      %s147 = ssub.s32 %s24, %s38
      %s148 = sor.u32 %s146, %s147
      %s149 = ssub.s32 %s25, %s34
      %s150 = sor.u32 %s148, %s149
      %p151 = scmp.eq.s32.totalorder %s150, 0
      %s153 = sadd.s32 %s152, 1
      %s154 = scalar_select %p151, %s152, %s153
      %p157 = pneg %p151
      %p158 = scmp.eq.s32.totalorder %s16, 1
      %p159 = por %p157, %p158
      %p160 = scmp.ne.s32.totalorder %s152, %s155
      %p161 = scmp.eq.s32.totalorder %s16, 0
      %p162 = por %p160, %p161
      %p163 = scmp.ne.s32.totalorder %s152, %s155
      %p164 = scmp.eq.s32.totalorder %s21, 1
      %p165 = por %p163, %p164
      %p166 = scmp.ne.s32.totalorder %s155, %s156
      %p167 = scmp.eq.s32.totalorder %s21, 0
      %p168 = por %p166, %p167
      %p169 = scmp.ne.s32.totalorder %s155, %s156
      %p170 = scmp.eq.s32.totalorder %s22, 1
      %p171 = por %p169, %p170
      %p173 = scmp.ne.s32.totalorder %s156, %s172
      %p174 = scmp.eq.s32.totalorder %s22, 0
      %p175 = por %p173, %p174
      %p176 = scmp.le.s32.totalorder 1, %s16
      %p177 = scmp.lt.s32.totalorder %s16, 3
      %p178 = pnand %p176, %p177
      %p179 = pneg %p178
      // Predicated region
      $region9: #{tpu_custom_call.1} parent=5 // pred_check
        _
      $region10: #{tpu_custom_call.1} parent=5 // pred_check_branch
        %181 = sbr.rel (%p178) target = $region12
      $region11: #{tpu_custom_call.1} parent=5 // pred_region
        %s182 = ssub.s32 %s16, 1
        // Predicated region
        $region13: #{tpu_custom_call.1} parent=11 // pred_check
          %p183 = pneg %p138
        $region14: #{tpu_custom_call.1} parent=11 // pred_check_branch
          %185 = sbr.rel (%p183) target = $region16
        $region15: #{tpu_custom_call.1} parent=11 // pred_region
          _
        $region16: #{tpu_custom_call.1} parent=11 // pred_fallthru
          _
      $region12: #{tpu_custom_call.1} parent=5 // pred_fallthru
        _
      %p186 = scmp.lt.s32.totalorder %s16, 2
      // Predicated region
      $region17: #{tpu_custom_call.1} parent=5 // pred_check
        %p187 = pneg %p186
      $region18: #{tpu_custom_call.1} parent=5 // pred_check_branch
        %189 = sbr.rel (%p187) target = $region20
      $region19: #{tpu_custom_call.1} parent=5 // pred_region
        // Predicated region
        $region21: #{tpu_custom_call.1} parent=19 // pred_check
          %p190 = pneg %p59
        $region22: #{tpu_custom_call.1} parent=19 // pred_check_branch
          %192 = sbr.rel (%p190) target = $region24
        $region23: #{tpu_custom_call.1} parent=19 // pred_region
          %s193 = sand.u32 %s49, 1
          %s194 = scalar_lea.sflag [#allocation3], %s193
          %s195 = sand.u32 %s49, 1
          %s196 = smul.addr %s195, 64
          %s197 = scalar_lea.vmem [#allocation2], %s196
          %s198 = smul.u32 4, %s23
          %s199 = smul.u32 2, %s24
          %201 = vsyncadd %s194, 0
          %s202 = sadd.s32 %s25, %s199
          %s203 = smul.addr %s198, 2
          %s204 = sadd.s32 %s202, %s203
          %s205 = smul.addr %s204, 8
          %s206 = scalar_lea.hbm %s0, %s205
          %s207 = sshll.u32 %s206, 4
          %s208 = int_to_ptr.hbm [resolvable:$true] %s207
          %s209 = sshll.u32 %s197, 4
          %s210 = int_to_ptr.vmem [resolvable:$true] %s209
          %215 = dma.hbm_to_vmem [thread:$0]  %s208, 1024, %s210, %s194, 128, 128, 8
        $region24: #{tpu_custom_call.1} parent=19 // pred_fallthru
          _
        // Predicated region
        $region25: #{tpu_custom_call.1} parent=19 // pred_check
          %p216 = pneg %p85
        $region26: #{tpu_custom_call.1} parent=19 // pred_check_branch
          %218 = sbr.rel (%p216) target = $region28
        $region27: #{tpu_custom_call.1} parent=19 // pred_region
          %s219 = smul.u32 4, %s23
          %p220 = scmp.lt.s32.totalorder %s219, 7
          %s221 = scalar_select %p220, %s219, 7
          %s222 = scalar_lea.vmem %s1, %s221
          %s223 = smul.u32 4, %s23
        $region28: #{tpu_custom_call.1} parent=19 // pred_fallthru
          _
        // Predicated region
        $region29: #{tpu_custom_call.1} parent=19 // pred_check
          %p224 = pneg %p111
        $region30: #{tpu_custom_call.1} parent=19 // pred_check_branch
          %226 = sbr.rel (%p224) target = $region32
        $region31: #{tpu_custom_call.1} parent=19 // pred_region
          %s227 = smul.u32 4, %s23
          %p228 = scmp.lt.s32.totalorder %s227, 7
          %s229 = scalar_select %p228, %s227, 7
          %s230 = scalar_lea.vmem %s2, %s229
          %s231 = smul.u32 4, %s23
        $region32: #{tpu_custom_call.1} parent=19 // pred_fallthru
          _
      $region20: #{tpu_custom_call.1} parent=5 // pred_fallthru
        _
      %p232 = scmp.le.s32.totalorder 1, %s16
      %p233 = scmp.lt.s32.totalorder %s16, 3
      %p234 = pnand %p232, %p233
      %p235 = pneg %p234
      // Predicated region
      $region33: #{tpu_custom_call.1} parent=5 // pred_check
        _
      $region34: #{tpu_custom_call.1} parent=5 // pred_check_branch
        %237 = sbr.rel (%p234) target = $region36
      $region35: #{tpu_custom_call.1} parent=5 // pred_region
        %s238 = ssub.s32 %s16, 1
        %s239 = sand.u32 %s52, 1
        %s240 = scalar_lea.sflag [#allocation3], %s239
        %s241 = sand.u32 %s52, 1
        %s242 = smul.addr %s241, 64
        %s243 = scalar_lea.vmem [#allocation2], %s242
        // Predicated region
        $region37: #{tpu_custom_call.1} parent=35 // pred_check
          %p244 = pneg %p65
        $region38: #{tpu_custom_call.1} parent=35 // pred_check_branch
          %246 = sbr.rel (%p244) target = $region40
        $region39: #{tpu_custom_call.1} parent=35 // pred_region
          %248 = dma.done %s240, 1024
        $region40: #{tpu_custom_call.1} parent=35 // pred_fallthru
          _
        %s249 = sand.u32 %s52, 1
        %s250 = scalar_lea.sflag [#allocation3], %s249
        %s251 = sand.u32 %s52, 1
        %s252 = smul.addr %s251, 64
        %s253 = scalar_lea.vmem [#allocation2], %s252
        %p254 = pneg %p65
        %p255 = pneg %p62
        %s256 = smul.u32 4, %s26
        %p257 = scmp.lt.s32.totalorder %s256, 7
        %s258 = scalar_select %p257, %s256, 7
        %s259 = scalar_lea.vmem %s1, %s258
        %p260 = pneg %p91
        %p261 = pneg %p88
        %s262 = smul.u32 4, %s26
        %p263 = scmp.lt.s32.totalorder %s262, 7
        %s264 = scalar_select %p263, %s262, 7
        %s265 = scalar_lea.vmem %s2, %s264
        %p266 = pneg %p117
        %p267 = pneg %p114
        %p268 = pneg %p138
        %p269 = pneg %p135
        %p270 = pneg %p168
        %p271 = pneg %p165
        %s272 = sand.u32 %s155, 1
        %s273 = scalar_lea.sflag [#allocation4], %s272
        %s274 = sand.u32 %s155, 1
        %s275 = smul.addr %s274, 32
        %s276 = scalar_lea.vmem [#allocation5], %s275
        %s277 = smul.u32 4, %s26
        %s278 = smul.u32 2, %s27
        %s279 = smul.u32 4, %s26
        %p280 = scmp.lt.s32.totalorder %s279, 7
        %s281 = scalar_select %p280, %s279, 7
        %s282 = scalar_lea.vmem %s1, %s281
        %s283 = smul.u32 4, %s26
        %s284 = smul.u32 4, %s26
        %p285 = scmp.lt.s32.totalorder %s284, 7
        %s286 = scalar_select %p285, %s284, 7
        %s287 = scalar_lea.vmem %s2, %s286
        %s288 = smul.u32 4, %s26
        %s289 = smul.u32 4, %s26
        %v290 = vld [vmem:[%s282] sm:$0x1]
        %v291 = vld [vmem:[%s282 + $0x1] sm:$0x1]
        %v292 = vld [vmem:[%s282 + $0x2] sm:$0x1]
        %v293 = vld [vmem:[%s282 + $0x3] sm:$0x1]
        %v294 = vld [vmem:[%s287] sm:$0x1]
        %v295 = vld [vmem:[%s287 + $0x1] sm:$0x1]
        %v296 = vld [vmem:[%s287 + $0x2] sm:$0x1]
        %v297 = vld [vmem:[%s287 + $0x3] sm:$0x1]
        %v298 = vld [vmem:[%s243] ss:$2 sm:$0xff]
        %s299 = scalar_lea.vmem %s243, 16 [#allocation2]
        %v300 = vld [vmem:[%s299] ss:$2 sm:$0xff]
        %s301 = scalar_lea.vmem %s243, 32 [#allocation2]
        %v302 = vld [vmem:[%s301] ss:$2 sm:$0xff]
        %s303 = scalar_lea.vmem %s243, 48 [#allocation2]
        %v304 = vld [vmem:[%s303] ss:$2 sm:$0xff]
        %v305 = vmul.f32 %v290, 0.25
        %v306 = vmul.f32 %v291, 0.25
        %v307 = vmul.f32 %v292, 0.25
        %v308 = vmul.f32 %v293, 0.25
        %v313 = vperm.slane %v305, 0
        %v314 = vperm.slane %v306, 0
        %v315 = vperm.slane %v307, 0
        %v316 = vperm.slane %v308, 0
        %317 = vset.pattern.permute.xlu0 0
        %318 = vperm.xlu0 %317, %v313
        %v319 = vpop.permute.xlu0 %318
        %321 = vset.pattern.permute.xlu0 0
        %322 = vperm.xlu0 %321, %v314
        %v323 = vpop.permute.xlu0 %322
        %325 = vset.pattern.permute.xlu0 0
        %326 = vperm.xlu0 %325, %v315
        %v327 = vpop.permute.xlu0 %326
        %329 = vset.pattern.permute.xlu0 0
        %330 = vperm.xlu0 %329, %v316
        %v331 = vpop.permute.xlu0 %330
        %v333 = vsub.f32 %v298, %v319
        %v334 = vsub.f32 %v300, %v323
        %v335 = vsub.f32 %v302, %v327
        %v336 = vsub.f32 %v304, %v331
        %s337 = scalar_lea.vmem %s243, 1 [#allocation2]
        %v338 = vld [vmem:[%s337] ss:$2 sm:$0xff]
        %s339 = scalar_lea.vmem %s243, 17 [#allocation2]
        %v340 = vld [vmem:[%s339] ss:$2 sm:$0xff]
        %s341 = scalar_lea.vmem %s243, 33 [#allocation2]
        %v342 = vld [vmem:[%s341] ss:$2 sm:$0xff]
        %s343 = scalar_lea.vmem %s243, 49 [#allocation2]
        %v344 = vld [vmem:[%s343] ss:$2 sm:$0xff]
        %v345 = vsub.f32 %v338, %v319
        %v346 = vsub.f32 %v340, %v323
        %v347 = vsub.f32 %v342, %v327
        %v348 = vsub.f32 %v344, %v331
        %v349 = vmax.f32 %v333, %v345
        %v350 = vmax.f32 %v334, %v346
        %v351 = vmax.f32 %v335, %v347
        %v352 = vmax.f32 %v336, %v348
        %v353 = vmul.f32 %v294, 0.25
        %v354 = vmul.f32 %v295, 0.25
        %v355 = vmul.f32 %v296, 0.25
        %v356 = vmul.f32 %v297, 0.25
        %v361 = vperm.slane %v353, 0
        %v362 = vperm.slane %v354, 0
        %v363 = vperm.slane %v355, 0
        %v364 = vperm.slane %v356, 0
        %365 = vset.pattern.permute.xlu0 0
        %366 = vperm.xlu0 %365, %v361
        %v367 = vpop.permute.xlu0 %366
        %369 = vset.pattern.permute.xlu0 0
        %370 = vperm.xlu0 %369, %v362
        %v371 = vpop.permute.xlu0 %370
        %373 = vset.pattern.permute.xlu0 0
        %374 = vperm.xlu0 %373, %v363
        %v375 = vpop.permute.xlu0 %374
        %377 = vset.pattern.permute.xlu0 0
        %378 = vperm.xlu0 %377, %v364
        %v379 = vpop.permute.xlu0 %378
        %v381 = vsub.f32 %v349, %v367
        %v382 = vsub.f32 %v350, %v371
        %v383 = vsub.f32 %v351, %v375
        %v384 = vsub.f32 %v352, %v379
        %vm385 = vcmask 1047680
        %386 = vrot.lane.b32.xlu0 %v349, 16
        %v387 = vpop.permute.xlu0 %386
        %v388 = vsel %vm385, %v387, %v349
        %389 = vrot.lane.b32.xlu0 %v350, 16
        %v390 = vpop.permute.xlu0 %389
        %v391 = vsel %vm385, %v390, %v350
        %392 = vrot.lane.b32.xlu0 %v351, 16
        %v393 = vpop.permute.xlu0 %392
        %v394 = vsel %vm385, %v393, %v351
        %395 = vrot.lane.b32.xlu0 %v352, 16
        %v396 = vpop.permute.xlu0 %395
        %v397 = vsel %vm385, %v396, %v352
        %398 = vrot.lane.b32.xlu0 %v388, 16
        %v399 = vpop.permute.xlu0 %398
        %400 = vrot.lane.b32.xlu0 %v391, 16
        %v401 = vpop.permute.xlu0 %400
        %402 = vrot.lane.b32.xlu0 %v394, 16
        %v403 = vpop.permute.xlu0 %402
        %404 = vrot.lane.b32.xlu0 %v397, 16
        %v405 = vpop.permute.xlu0 %404
        %v406 = vsel %vm385, %v399, %v349
        %v407 = vsel %vm385, %v401, %v350
        %v408 = vsel %vm385, %v403, %v351
        %v409 = vsel %vm385, %v405, %v352
        %v410 = vsub.f32 %v406, %v367
        %v411 = vsub.f32 %v407, %v371
        %v412 = vsub.f32 %v408, %v375
        %v413 = vsub.f32 %v409, %v379
        %418 = vrot.lane.b32.xlu0 %v410, 127
        %v419 = vpop.permute.xlu0 %418
        %420 = vrot.lane.b32.xlu0 %v411, 127
        %v421 = vpop.permute.xlu0 %420
        %422 = vrot.lane.b32.xlu0 %v412, 127
        %v423 = vpop.permute.xlu0 %422
        %424 = vrot.lane.b32.xlu0 %v413, 127
        %v425 = vpop.permute.xlu0 %424
        %v430 = vmax.f32 %v381, %v419
        %v431 = vmax.f32 %v382, %v421
        %v432 = vmax.f32 %v383, %v423
        %v433 = vmax.f32 %v384, %v425
        %v434 = vld [vmem:[%s3] sm:$0xff]
        %v435 = vld [vmem:[%s3 + $0x8] sm:$0xff]
        %vm436 = vcmask 130048
        %v438 = vsel %vm436, %v430, 0
        %v441 = vsel %vm436, %v431, 0
        %v444 = vsel %vm436, %v432, 0
        %v447 = vsel %vm436, %v433, 0
        %449 = vmatpush.msra.mxu0 0.0
        %450 = vmatpush.msra.mxu0 0.0
        %451 = vmatpush.msra.mxu0 0.0
        %452 = vmatpush.msra.mxu0 0.0
        %453 = vmatpush.msra.mxu0 0.0
        %454 = vmatpush.msra.mxu0 0.0
        %455 = vmatpush.msra.mxu0 0.0
        %456 = vmatpush.msra.mxu0 0.0
        %457 = vmatpush.msra.mxu0 0.0
        %458 = vmatpush.msra.mxu0 0.0
        %459 = vmatpush.msra.mxu0 0.0
        %460 = vmatpush.msra.mxu0 0.0
        %461 = vmatpush.msra.mxu0 0.0
        %462 = vmatpush.msra.mxu0 0.0
        %463 = vmatpush.msra.mxu0 %v435
        %464 = vmatpush.msra.mxu0 %v434
        %465 = vmatmul.f32.gmra.mxu0 %v438
        %v466 = vpop.f32.mrf.mxu0
        %v467 = vadd.f32 0.0, %v466
        %468 = vmatmul.f32.gmra.mxu0 %v441
        %v469 = vpop.f32.mrf.mxu0
        %v470 = vadd.f32 0.0, %v469
        %471 = vmatmul.f32.gmra.mxu0 %v444
        %v472 = vpop.f32.mrf.mxu0
        %v473 = vadd.f32 0.0, %v472
        %474 = vmatmul.f32.gmra.mxu0 %v447
        %v475 = vpop.f32.mrf.mxu0
        %v476 = vadd.f32 0.0, %v475
        %477 = vdwg.mxu0
        %vm478 = vcmask 64512
        %479 = vst.msk [vmem:[%s276] sm:$0xff] %vm478, %v467
        %480 = vst.msk [vmem:[%s276 + $0x8] sm:$0xff] %vm478, %v470
        %481 = vst.msk [vmem:[%s276 + $0x10] sm:$0xff] %vm478, %v473
        %482 = vst.msk [vmem:[%s276 + $0x18] sm:$0xff] %vm478, %v476
        %s483 = sand.u32 %s155, 1
        %s484 = scalar_lea.sflag [#allocation4], %s483
        %s485 = sand.u32 %s155, 1
        %s486 = smul.addr %s485, 32
        %s487 = scalar_lea.vmem [#allocation5], %s486
        // Predicated region
        $region41: #{tpu_custom_call.1} parent=35 // pred_check
          %p488 = pneg %p165
        $region42: #{tpu_custom_call.1} parent=35 // pred_check_branch
          %490 = sbr.rel (%p488) target = $region44
        $region43: #{tpu_custom_call.1} parent=35 // pred_region
          %s491 = smul.u32 4, %s26
          %493 = vsyncadd %s484, 0
          %s494 = sadd.s32 %s28, %s27
          %s495 = sadd.s32 %s494, %s491
          %s496 = smul.addr %s495, 8
          %s497 = scalar_lea.hbm %s4, %s496
          %s498 = sshll.u32 %s487, 4
          %s499 = int_to_ptr.vmem [resolvable:$true] %s498
          %s500 = sshll.u32 %s497, 4
          %s501 = int_to_ptr.hbm [resolvable:$true] %s500
          %506 = dma.vmem_to_hbm [thread:$0]  %s499, 512, %s501, %s484, 128, 128, 8
        $region44: #{tpu_custom_call.1} parent=35 // pred_fallthru
          _
      $region36: #{tpu_custom_call.1} parent=5 // pred_fallthru
        _
      %p507 = scmp.le.s32.totalorder 2, %s16
      // Predicated region
      $region45: #{tpu_custom_call.1} parent=5 // pred_check
        %p508 = pneg %p507
      $region46: #{tpu_custom_call.1} parent=5 // pred_check_branch
        %510 = sbr.rel (%p508) target = $region48
      $region47: #{tpu_custom_call.1} parent=5 // pred_region
        %s511 = ssub.s32 %s16, 2
        // Predicated region
        $region49: #{tpu_custom_call.1} parent=47 // pred_check
          %p512 = pneg %p171
        $region50: #{tpu_custom_call.1} parent=47 // pred_check_branch
          %514 = sbr.rel (%p512) target = $region52
        $region51: #{tpu_custom_call.1} parent=47 // pred_region
          %s515 = sand.u32 %s156, 1
          %s516 = scalar_lea.sflag [#allocation4], %s515
          %s517 = sand.u32 %s156, 1
          %s518 = smul.addr %s517, 32
          %s519 = scalar_lea.vmem [#allocation5], %s518
          %521 = dma.done %s516, 512
        $region52: #{tpu_custom_call.1} parent=47 // pred_fallthru
          _
      $region48: #{tpu_custom_call.1} parent=5 // pred_fallthru
        _
    $region6: #{tpu_custom_call.1} parent=1 // loop_footer
      %s20 = sadd.s32 1, %s16
    $region7: #{tpu_custom_call.1} parent=1 // loop_footer_branch
      %15 = sbr.rel target = $region3
    $region8: #{tpu_custom_call.1} parent=1 // loop_exit
      _
    %522 = vsyncpa [#allocation3], 1
    %s523 = scalar_lea.sflag [#allocation3], 1
    %524 = vsyncpa %s523, 1
    %525 = vsyncpa [#allocation4], 1
    %s526 = scalar_lea.sflag [#allocation4], 1
    %527 = vsyncpa %s526, 1

</llo_original>
